<compile_context>
chip_gen: v5e
topology: v5e:2x2
jax: 0.10.0
libtpu: 0.0.40
codegen_flags: <defaults>
</compile_context>

<pallas_src>
import functools

import jax
import jax.numpy as jnp
from jax.experimental import pallas as pl
from jax.experimental.pallas import tpu as pltpu

PI = 3.141592653589793


def _kld_kernel(pt_ref, out_ref, *, taf):
    # pt_ref  : (10, TR, 128) f32 ; rows 0..4 = pred [x,y,w,h,angle_deg],
    #                               rows 5..9 = target [x,y,w,h,angle_deg]
    # out_ref : (TR, 128) f32
    px, py, pw, ph, pa = (pt_ref[0], pt_ref[1], pt_ref[2],
                          pt_ref[3], pt_ref[4])
    tx, ty, tw, th, ta = (pt_ref[5], pt_ref[6], pt_ref[7],
                          pt_ref[8], pt_ref[9])

    dx = px - tx
    dy = py - ty

    p_rad = pa * (PI / 180.0)
    t_rad = ta * (PI / 180.0)
    d_rad = p_rad - t_rad

    cos_t = jnp.cos(t_rad)
    sin_t = jnp.sin(t_rad)
    sin_d = jnp.sin(d_rad)
    sin_d2 = sin_d * sin_d
    cos_d2 = 1.0 - sin_d2            # only cos(d)^2 is needed -> drop the cos()

    tw2 = tw * tw
    th2 = th * th
    pw2 = pw * pw
    ph2 = ph * ph

    # Single divide yields both reciprocals (EUP is the near-binding unit on
    # v7x; this removes one full divide macro-sequence per element).
    inv = 1.0 / (tw2 * th2)
    inv_tw2 = th2 * inv
    inv_th2 = tw2 * inv

    u = dx * cos_t + dy * sin_t
    v = dy * cos_t - dx * sin_t

    term1 = 2.0 * (u * u * inv_tw2 + v * v * inv_th2)
    term2 = 0.5 * ((ph2 * inv_tw2 + pw2 * inv_th2) * sin_d2
                   + (ph2 * inv_th2 + pw2 * inv_tw2) * cos_d2)
    # 0.5*(log(th2/ph2) + log(tw2/pw2)) == log((tw*th)/(pw*ph)).
    term3 = jnp.log((tw * th) / (pw * ph))

    kld = term1 + term2 + term3 - 1.0
    # Exact divide (not approx reciprocal) to stay within the 2e-5 tolerance.
    out_ref[...] = 1.0 - 1.0 / (taf + jnp.log1p(kld))


def kld_loss_pallas(pred, target, taf=1.0, max_block_rows=1024):
    """Equivalent of KLDloss(taf, reduction='none').forward(pred, target)."""
    pred = pred.reshape(-1, 5)
    target = target.reshape(-1, 5)
    assert pred.shape[0] == target.shape[0]
    n = pred.shape[0]

    # Lane-dense tiling: N boxes -> (R, 128) lanes.  tr is chosen adaptively:
    # num_blocks = cdiv(R, max_block_rows); tr = round_up(cdiv(R, num_blocks), 8)
    # so over-padding is bounded by <8 rows of 128 even when tr is large.
    r = int(pl.cdiv(n, 128))
    num_blocks = max(1, int(pl.cdiv(r, int(max_block_rows))))
    tr = int(pl.cdiv(int(pl.cdiv(r, num_blocks)), 8)) * 8
    r_pad = int(pl.cdiv(r, tr)) * tr
    n_pad = r_pad * 128

    # Single pack for both operands: (N,5)+(N,5) -> (N,10) -> (10, R_pad, 128).
    # Pad with 1.0 so padded lanes stay finite (sliced away later).
    both = jnp.concatenate(
        [pred.astype(jnp.float32), target.astype(jnp.float32)], axis=1)   # (N,10)
    both_t = jnp.pad(both.T, ((0, 0), (0, n_pad - n)), constant_values=1.0)
    pt_packed = both_t.reshape(10, r_pad, 128)

    out = pl.pallas_call(
        functools.partial(_kld_kernel, taf=float(taf)),
        out_shape=jax.ShapeDtypeStruct((r_pad, 128), jnp.float32),
        grid_spec=pltpu.PrefetchScalarGridSpec(
            num_scalar_prefetch=0,
            grid=(r_pad // tr,),
            in_specs=[
                pl.BlockSpec((10, tr, 128), lambda i: (0, i, 0)),
            ],
            out_specs=pl.BlockSpec((tr, 128), lambda i: (i, 0)),
        ),
        compiler_params=pltpu.CompilerParams(
            dimension_semantics=("parallel",)),
    )(pt_packed)

    return out.reshape(n_pad)[:n]


def kld_loss_ref(pred, target, taf=1.0):
    """Pure-JAX reference mirroring the PyTorch forward exactly."""
    pred = pred.reshape(-1, 5).astype(jnp.float32)
    target = target.reshape(-1, 5).astype(jnp.float32)
    dx = pred[:, 0] - target[:, 0]
    dy = pred[:, 1] - target[:, 1]
    pr = PI * pred[:, 4] / 180.0
    tr = PI * target[:, 4] / 180.0
    dr = pr - tr
    kld = (
        0.5
        * (
            4.0 * jnp.square(dx * jnp.cos(tr) + dy * jnp.sin(tr)) / jnp.square(target[:, 2])
            + 4.0 * jnp.square(dy * jnp.cos(tr) - dx * jnp.sin(tr)) / jnp.square(target[:, 3])
        )
        + 0.5
        * (
            jnp.square(pred[:, 3]) / jnp.square(target[:, 2]) * jnp.square(jnp.sin(dr))
            + jnp.square(pred[:, 2]) / jnp.square(target[:, 3]) * jnp.square(jnp.sin(dr))
            + jnp.square(pred[:, 3]) / jnp.square(target[:, 3]) * jnp.square(jnp.cos(dr))
            + jnp.square(pred[:, 2]) / jnp.square(target[:, 2]) * jnp.square(jnp.cos(dr))
        )
        + 0.5
        * (
            jnp.log(jnp.square(target[:, 3]) / jnp.square(pred[:, 3]))
            + jnp.log(jnp.square(target[:, 2]) / jnp.square(pred[:, 2]))
        )
        - 1.0
    )
    return 1.0 - 1.0 / (taf + jnp.log(kld + 1.0))


if __name__ == "__main__":
    key = jax.random.PRNGKey(0)
    k1, k2, k3, k4, k5, k6 = jax.random.split(key, 6)

    n = 200  # number of boxes (non-multiple of 128 to exercise padding)

    # pred / target rows: [x, y, w, h, angle_deg]; w, h strictly positive.
    pred = jnp.concatenate(
        [
            jax.random.normal(k1, (n, 2)) * 4.0,                          # x, y
            jax.random.uniform(k2, (n, 2), minval=1.0, maxval=8.0),       # w, h
            jax.random.uniform(k3, (n, 1), minval=-90.0, maxval=90.0),    # angle
        ],
        axis=1,
    ).astype(jnp.float32)
    target = jnp.concatenate(
        [
            jax.random.normal(k4, (n, 2)) * 4.0,
            jax.random.uniform(k5, (n, 2), minval=1.0, maxval=8.0),
            jax.random.uniform(k6, (n, 1), minval=-90.0, maxval=90.0),
        ],
        axis=1,
    ).astype(jnp.float32)

    out = kld_loss_pallas(pred, target, taf=1.0)
    out = jax.block_until_ready(out)

    ref = kld_loss_ref(pred, target, taf=1.0)
    assert out.shape == (n,)
    assert jnp.allclose(out, ref, atol=2e-5, rtol=2e-5), float(jnp.max(jnp.abs(out - ref)))

    print("KERNEL_OK")
</pallas_src>

<mosaic_0001>
module attributes {stable_mosaic.version = 11 : i64} {
  func.func @_kld_kernel(%arg0: i32, %arg1: memref<10x8x128xf32, #tpu.memory_space<vmem>>, %arg2: memref<8x128xf32, #tpu.memory_space<vmem>>) attributes {dimension_semantics = [#tpu.dimension_semantics<parallel>], iteration_bounds = array<i64: 1>, scalar_prefetch = 0 : i64, scratch_operands = 0 : i64, tpu.core_type = #tpu.core_type<tc>, window_params = [{transform_indices = @transform_0, window_bounds = array<i64: 10, 8, 128>}, {transform_indices = @transform_1, window_bounds = array<i64: 8, 128>}]} {
    %c0 = arith.constant 0 : index
    %c0_0 = arith.constant 0 : index
    %c0_1 = arith.constant 0 : index
    %0 = vector.load %arg1[%c0, %c0_0, %c0_1] : memref<10x8x128xf32, #tpu.memory_space<vmem>>, vector<1x8x128xf32>
    %1 = vector.shape_cast %0 : vector<1x8x128xf32> to vector<8x128xf32>
    %c1 = arith.constant 1 : index
    %c0_2 = arith.constant 0 : index
    %c0_3 = arith.constant 0 : index
    %2 = vector.load %arg1[%c1, %c0_2, %c0_3] : memref<10x8x128xf32, #tpu.memory_space<vmem>>, vector<1x8x128xf32>
    %3 = vector.shape_cast %2 : vector<1x8x128xf32> to vector<8x128xf32>
    %c2 = arith.constant 2 : index
    %c0_4 = arith.constant 0 : index
    %c0_5 = arith.constant 0 : index
    %4 = vector.load %arg1[%c2, %c0_4, %c0_5] : memref<10x8x128xf32, #tpu.memory_space<vmem>>, vector<1x8x128xf32>
    %5 = vector.shape_cast %4 : vector<1x8x128xf32> to vector<8x128xf32>
    %c3 = arith.constant 3 : index
    %c0_6 = arith.constant 0 : index
    %c0_7 = arith.constant 0 : index
    %6 = vector.load %arg1[%c3, %c0_6, %c0_7] : memref<10x8x128xf32, #tpu.memory_space<vmem>>, vector<1x8x128xf32>
    %7 = vector.shape_cast %6 : vector<1x8x128xf32> to vector<8x128xf32>
    %c4 = arith.constant 4 : index
    %c0_8 = arith.constant 0 : index
    %c0_9 = arith.constant 0 : index
    %8 = vector.load %arg1[%c4, %c0_8, %c0_9] : memref<10x8x128xf32, #tpu.memory_space<vmem>>, vector<1x8x128xf32>
    %9 = vector.shape_cast %8 : vector<1x8x128xf32> to vector<8x128xf32>
    %c5 = arith.constant 5 : index
    %c0_10 = arith.constant 0 : index
    %c0_11 = arith.constant 0 : index
    %10 = vector.load %arg1[%c5, %c0_10, %c0_11] : memref<10x8x128xf32, #tpu.memory_space<vmem>>, vector<1x8x128xf32>
    %11 = vector.shape_cast %10 : vector<1x8x128xf32> to vector<8x128xf32>
    %c6 = arith.constant 6 : index
    %c0_12 = arith.constant 0 : index
    %c0_13 = arith.constant 0 : index
    %12 = vector.load %arg1[%c6, %c0_12, %c0_13] : memref<10x8x128xf32, #tpu.memory_space<vmem>>, vector<1x8x128xf32>
    %13 = vector.shape_cast %12 : vector<1x8x128xf32> to vector<8x128xf32>
    %c7 = arith.constant 7 : index
    %c0_14 = arith.constant 0 : index
    %c0_15 = arith.constant 0 : index
    %14 = vector.load %arg1[%c7, %c0_14, %c0_15] : memref<10x8x128xf32, #tpu.memory_space<vmem>>, vector<1x8x128xf32>
    %15 = vector.shape_cast %14 : vector<1x8x128xf32> to vector<8x128xf32>
    %c8 = arith.constant 8 : index
    %c0_16 = arith.constant 0 : index
    %c0_17 = arith.constant 0 : index
    %16 = vector.load %arg1[%c8, %c0_16, %c0_17] : memref<10x8x128xf32, #tpu.memory_space<vmem>>, vector<1x8x128xf32>
    %17 = vector.shape_cast %16 : vector<1x8x128xf32> to vector<8x128xf32>
    %c9 = arith.constant 9 : index
    %c0_18 = arith.constant 0 : index
    %c0_19 = arith.constant 0 : index
    %18 = vector.load %arg1[%c9, %c0_18, %c0_19] : memref<10x8x128xf32, #tpu.memory_space<vmem>>, vector<1x8x128xf32>
    %19 = vector.shape_cast %18 : vector<1x8x128xf32> to vector<8x128xf32>
    %20 = arith.subf %1, %11 : vector<8x128xf32>
    %21 = arith.subf %3, %13 : vector<8x128xf32>
    %cst = arith.constant 0.0174532924 : f32
    %22 = vector.broadcast %cst : f32 to vector<8x128xf32>
    %23 = arith.mulf %9, %22 : vector<8x128xf32>
    %cst_20 = arith.constant 0.0174532924 : f32
    %24 = vector.broadcast %cst_20 : f32 to vector<8x128xf32>
    %25 = arith.mulf %19, %24 : vector<8x128xf32>
    %26 = arith.subf %23, %25 : vector<8x128xf32>
    %27 = math.cos %25 : vector<8x128xf32>
    %28 = math.sin %25 : vector<8x128xf32>
    %29 = math.sin %26 : vector<8x128xf32>
    %30 = arith.mulf %29, %29 : vector<8x128xf32>
    %cst_21 = arith.constant 1.000000e+00 : f32
    %31 = vector.broadcast %cst_21 : f32 to vector<8x128xf32>
    %32 = arith.subf %31, %30 : vector<8x128xf32>
    %33 = arith.mulf %15, %15 : vector<8x128xf32>
    %34 = arith.mulf %17, %17 : vector<8x128xf32>
    %35 = arith.mulf %5, %5 : vector<8x128xf32>
    %36 = arith.mulf %7, %7 : vector<8x128xf32>
    %37 = arith.mulf %33, %34 : vector<8x128xf32>
    %cst_22 = arith.constant 1.000000e+00 : f32
    %38 = vector.broadcast %cst_22 : f32 to vector<8x128xf32>
    %39 = arith.divf %38, %37 : vector<8x128xf32>
    %40 = arith.mulf %34, %39 : vector<8x128xf32>
    %41 = arith.mulf %33, %39 : vector<8x128xf32>
    %42 = arith.mulf %20, %27 : vector<8x128xf32>
    %43 = arith.mulf %21, %28 : vector<8x128xf32>
    %44 = arith.addf %42, %43 : vector<8x128xf32>
    %45 = arith.mulf %21, %27 : vector<8x128xf32>
    %46 = arith.mulf %20, %28 : vector<8x128xf32>
    %47 = arith.subf %45, %46 : vector<8x128xf32>
    %48 = arith.mulf %44, %44 : vector<8x128xf32>
    %49 = arith.mulf %48, %40 : vector<8x128xf32>
    %50 = arith.mulf %47, %47 : vector<8x128xf32>
    %51 = arith.mulf %50, %41 : vector<8x128xf32>
    %52 = arith.addf %49, %51 : vector<8x128xf32>
    %cst_23 = arith.constant 2.000000e+00 : f32
    %53 = vector.broadcast %cst_23 : f32 to vector<8x128xf32>
    %54 = arith.mulf %53, %52 : vector<8x128xf32>
    %55 = arith.mulf %36, %40 : vector<8x128xf32>
    %56 = arith.mulf %35, %41 : vector<8x128xf32>
    %57 = arith.addf %55, %56 : vector<8x128xf32>
    %58 = arith.mulf %57, %30 : vector<8x128xf32>
    %59 = arith.mulf %36, %41 : vector<8x128xf32>
    %60 = arith.mulf %35, %40 : vector<8x128xf32>
    %61 = arith.addf %59, %60 : vector<8x128xf32>
    %62 = arith.mulf %61, %32 : vector<8x128xf32>
    %63 = arith.addf %58, %62 : vector<8x128xf32>
    %cst_24 = arith.constant 5.000000e-01 : f32
    %64 = vector.broadcast %cst_24 : f32 to vector<8x128xf32>
    %65 = arith.mulf %64, %63 : vector<8x128xf32>
    %66 = arith.mulf %15, %17 : vector<8x128xf32>
    %67 = arith.mulf %5, %7 : vector<8x128xf32>
    %68 = arith.divf %66, %67 : vector<8x128xf32>
    %69 = math.log %68 : vector<8x128xf32>
    %70 = arith.addf %54, %65 : vector<8x128xf32>
    %71 = arith.addf %70, %69 : vector<8x128xf32>
    %cst_25 = arith.constant 1.000000e+00 : f32
    %72 = vector.broadcast %cst_25 : f32 to vector<8x128xf32>
    %73 = arith.subf %71, %72 : vector<8x128xf32>
    %74 = math.log1p %73 : vector<8x128xf32>
    %cst_26 = arith.constant 1.000000e+00 : f32
    %75 = vector.broadcast %cst_26 : f32 to vector<8x128xf32>
    %76 = arith.addf %75, %74 : vector<8x128xf32>
    %cst_27 = arith.constant 1.000000e+00 : f32
    %77 = vector.broadcast %cst_27 : f32 to vector<8x128xf32>
    %78 = arith.divf %77, %76 : vector<8x128xf32>
    %cst_28 = arith.constant 1.000000e+00 : f32
    %79 = vector.broadcast %cst_28 : f32 to vector<8x128xf32>
    %80 = arith.subf %79, %78 : vector<8x128xf32>
    %c0_29 = arith.constant 0 : index
    %c0_30 = arith.constant 0 : index
    %81 = vector.load %arg2[%c0_29, %c0_30] : memref<8x128xf32, #tpu.memory_space<vmem>>, vector<8x128xf32>
    tpu.vector_store %arg2[%c0_29, %c0_30], %80 {strides = array<i32>} : memref<8x128xf32, #tpu.memory_space<vmem>>, vector<8x128xf32>,
    return
  }
  func.func @transform_0(%arg0: i32) -> (i32, i32, i32) {
    %c0_i32 = arith.constant 0 : i32
    %c0_i32_0 = arith.constant 0 : i32
    %c0_i32_1 = arith.constant 0 : i32
    return %c0_i32, %arg0, %c0_i32_0 : i32, i32, i32
  }
  func.func @transform_1(%arg0: i32) -> (i32, i32) {
    %c0_i32 = arith.constant 0 : i32
    %c0_i32_0 = arith.constant 0 : i32
    return %arg0, %c0_i32 : i32, i32
  }
}

</mosaic_0001>

<llo_original>
// kernel: tpu_custom_call.1
$region0: #{tpu_custom_call.1}
  #allocation0 [shape = 'u32[]', space=smem, size = 0x4, offset = 0x4, fixed_abs, tag = 'smem constant byte address 0x4 - core index']
  #allocation1 [shape = 'u32[72,128]{1,0:T(1,128)}', space=vmem, size = 0x9000, scoped, tag = 'internal scratch']
  %s0 = inlined_call_operand.hbm [shape: f32[10,8,128], index: 0, kind: input, shape index: {}]
  %s1 = inlined_call_operand.hbm [shape: f32[8,128], index: 1, kind: output, shape index: {}]
  %s2 = sld [smem:[#allocation0]]
  $region18: #{tpu_custom_call.1} parent=0
    _
  %s4 = ssub.s32 1, %s2
  %s5 = scalar_select 0, %s4, %s2
  $region1: #{tpu_custom_call.1} parent=0
    #allocation2 [shape = 'u8[40960]{0}', space=vmem, size = 0xa000, scoped, tag = 'input window, operand 0, single buffered']
    #allocation3 [shape = 's32[1]{0}', space=sflag, size = 0x4, scoped, tag = 'scoped memory for tpu_custom_call.1']
    #allocation4 [shape = 's32[1]{0}', space=sflag, size = 0x4, scoped, tag = 'scoped memory for tpu_custom_call.1']
    #allocation5 [shape = 'u8[4096]{0}', space=vmem, size = 0x1000, scoped, tag = 'output window, operand 0, single buffered']
    %6 = vsyncpa [#allocation3], 0
    %7 = vsyncpa [#allocation4], 0
    // Predicated region
    $region2: #{tpu_custom_call.1} parent=1 // pred_check
      _
    $region3: #{tpu_custom_call.1} parent=1 // pred_check_branch
      %9 = sbr.rel (0) target = $region5
    $region4: #{tpu_custom_call.1} parent=1 // pred_region
      %11 = vsyncadd [#allocation3], 0
      %s12 = sshll.u32 %s0, 4
      %s13 = int_to_ptr.hbm [resolvable:$true] %s12
      %s14 = sshll.u32 [#allocation2], 4
      %s15 = int_to_ptr.vmem [resolvable:$true] %s14
      %20 = dma.hbm_to_vmem [thread:$0]  %s13, 1280, %s15, [#allocation3], 128, 128, 8
    $region5: #{tpu_custom_call.1} parent=1 // pred_fallthru
      _
    // Predicated region
    $region6: #{tpu_custom_call.1} parent=1 // pred_check
      _
    $region7: #{tpu_custom_call.1} parent=1 // pred_check_branch
      %22 = sbr.rel (0) target = $region9
    $region8: #{tpu_custom_call.1} parent=1 // pred_region
      %24 = dma.done [#allocation3], 1280
    $region9: #{tpu_custom_call.1} parent=1 // pred_fallthru
      _
    %v25 = vld [vmem:[#allocation2] sm:$0xff]
    %s26 = scalar_lea.vmem [#allocation2], 8
    %v27 = vld [vmem:[%s26] sm:$0xff]
    %s28 = scalar_lea.vmem [#allocation2], 16
    %v29 = vld [vmem:[%s28] sm:$0xff]
    %s30 = scalar_lea.vmem [#allocation2], 24
    %v31 = vld [vmem:[%s30] sm:$0xff]
    %s32 = scalar_lea.vmem [#allocation2], 32
    %v33 = vld [vmem:[%s32] sm:$0xff]
    %s34 = scalar_lea.vmem [#allocation2], 40
    %v35 = vld [vmem:[%s34] sm:$0xff]
    %s36 = scalar_lea.vmem [#allocation2], 48
    %v37 = vld [vmem:[%s36] sm:$0xff]
    %s38 = scalar_lea.vmem [#allocation2], 56
    %v39 = vld [vmem:[%s38] sm:$0xff]
    %s40 = scalar_lea.vmem [#allocation2], 64
    %v41 = vld [vmem:[%s40] sm:$0xff]
    %s42 = scalar_lea.vmem [#allocation2], 72
    %v43 = vld [vmem:[%s42] sm:$0xff]
    %v44 = vsub.f32 %v25, %v35
    %v45 = vsub.f32 %v27, %v37
    %v46 = vmul.f32 %v33, 0.017453292
    %v47 = vmul.f32 %v43, 0.017453292
    %v48 = vsub.f32 %v46, %v47
    %v49 = vand.u32 2147483647, %v47
    %vm50 = vcmp.le.f32.partialorder %v49, 0.7853982
    %vm51 = vcmp.lt.s32.totalorder %v47, 0
    %v52 = vand.u32 %v47, 2139095040
    %v53 = vshrl.u32 %v52, 23
    %v54 = vsub.s32 %v53, 127
    %v55 = vand.u32 2147483647, %v47
    %v56 = vand.u32 %v55, 8388607
    %v57 = vor.u32 %v56, 8388608
    %v58 = vsub.s32 0, %v57
    %v59 = vadd.s32 %v54, 1
    %vm60 = vcmp.gt.s32.totalorder %v59, 0
    %v61 = vsel %vm60, %v59, 0
    %v62 = vshrl.u32 %v61, 5
    %v63 = vand.u32 %v61, 31
    %v64 = vsub.s32 32, %v63
    %v65 = vshrl.u32 683565275, %v64
    %v66 = vshll.u32 683565275, %v63
    %v67 = vshrl.u32 2475754826, %v64
    %v68 = vor.u32 %v66, %v67
    %v69 = vshll.u32 2475754826, %v63
    %v70 = vshrl.u32 2131351028, %v64
    %v71 = vor.u32 %v69, %v70
    %v72 = vshll.u32 2131351028, %v63
    %v73 = vshrl.u32 2102212464, %v64
    %v74 = vor.u32 %v72, %v73
    %v75 = vshll.u32 2102212464, %v63
    %v76 = vshrl.u32 920167782, %v64
    %v77 = vor.u32 %v75, %v76
    %v78 = vshll.u32 920167782, %v63
    %v79 = vshrl.u32 1326507024, %v64
    %v80 = vor.u32 %v78, %v79
    %vm81 = vcmp.lt.s32.totalorder %v62, 1
    %vm82 = vcmp.lt.s32.totalorder %v62, 2
    %vm83 = vcmp.lt.s32.totalorder %v62, 3
    %vm84 = vcmp.lt.s32.totalorder %v62, 4
    %v85 = vsel %vm81, %v65, %v68
    %v86 = vsel %vm84, %v74, 2102212464
    %v87 = vsel %vm83, %v71, %v86
    %v88 = vsel %vm82, %v85, %v87
    %v89 = vsel %vm81, %v68, %v71
    %v90 = vsel %vm84, %v77, 920167782
    %v91 = vsel %vm83, %v74, %v90
    %v92 = vsel %vm82, %v89, %v91
    %v93 = vsel %vm81, %v71, %v74
    %v94 = vsel %vm84, %v80, 1326507024
    %v95 = vsel %vm83, %v77, %v94
    %v96 = vsel %vm82, %v93, %v95
    %v97 = vshll.u32 %v57, 8
    %v98 = vand.u32 %v97, 65535
    %v99 = vshrl.u32 %v97, 16
    %v100 = vand.u32 %v96, 65535
    %v101 = vshrl.u32 %v96, 16
    %v102 = vmul.u32 %v98, %v100
    %v103 = vmul.u32 %v98, %v101
    %v104 = vmul.u32 %v99, %v100
    %v105 = vmul.u32 %v99, %v101
    %v106 = vshll.u32 %v103, 16
    %v107 = vshrl.u32 %v103, 16
    %v108 = vshll.u32 %v104, 16
    %v109 = vshrl.u32 %v104, 16
    %vm110 = vc.u32 %v102, %v106
    %v111 = vsel %vm110, 1, 0
    %v112 = vadd.s32 %v102, %v106
    %v113 = vadd.s32 %v105, %v111
    %vm114 = vc.u32 %v112, %v108
    %v115 = vsel %vm114, 1, 0
    %v116 = vadd.s32 %v112, %v108
    %v117 = vadd.s32 %v113, %v115
    %v118 = vadd.s32 %v117, %v107
    %v119 = vadd.s32 %v118, %v109
    %v120 = vand.u32 %v97, 65535
    %v121 = vshrl.u32 %v97, 16
    %v122 = vand.u32 %v92, 65535
    %v123 = vshrl.u32 %v92, 16
    %v124 = vmul.u32 %v120, %v122
    %v125 = vmul.u32 %v120, %v123
    %v126 = vmul.u32 %v121, %v122
    %v127 = vmul.u32 %v121, %v123
    %v128 = vshll.u32 %v125, 16
    %v129 = vshrl.u32 %v125, 16
    %v130 = vshll.u32 %v126, 16
    %v131 = vshrl.u32 %v126, 16
    %vm132 = vc.u32 %v124, %v128
    %v133 = vsel %vm132, 1, 0
    %v134 = vadd.s32 %v124, %v128
    %v135 = vadd.s32 %v127, %v133
    %vm136 = vc.u32 %v134, %v130
    %v137 = vsel %vm136, 1, 0
    %v138 = vadd.s32 %v134, %v130
    %v139 = vadd.s32 %v135, %v137
    %v140 = vadd.s32 %v139, %v129
    %v141 = vadd.s32 %v140, %v131
    %v142 = vmul.u32 %v97, %v88
    %v143 = vadd.s32 %v119, %v138
    %vm144 = vc.u32 %v119, %v138
    %v145 = vadd.s32 %v141, 1
    %v146 = vsel %vm144, %v145, %v141
    %v147 = vadd.s32 %v142, %v146
    %v148 = vadd.s32 %v147, 536870912
    %v149 = vshrl.u32 %v148, 30
    %v150 = vshll.u32 %v149, 30
    %v151 = vsub.s32 %v147, %v150
    %vm152 = vcmp.lt.s32.totalorder %v151, 0
    %v153 = vsub.s32 0, %v151
    %v154 = vsel %vm152, %v153, %v151
    %v155 = vclz %v154
    %v156 = vsub.s32 %v155, 2
    %vm157 = vcmp.gt.s32.totalorder 0, %v156
    %v158 = vsel %vm157, 0, %v156
    %v159 = vsub.s32 32, %v158
    %v160 = vshll.u32 %v151, %v158
    %v161 = vshrl.u32 %v143, %v159
    %v162 = vor.u32 %v160, %v161
    %v163 = vsub.s32 4294967266, %v158
    %v164 = vadd.s32 %v163, 127
    %v165 = vshll.u32 %v164, 23
    %v166 = vor.u32 4788187, %v165
    %v167 = vand.u32 2147483647, %v166
    %v169 = vcvt.s32.f32 %v162
    %v170 = vmul.f32 %v169, %v167
    %v171 = vxor.u32 %v170, 2147483648
    %v172 = vsel %vm51, %v171, %v170
    %v173 = vsub.s32 4, %v149
    %v174 = vsel %vm51, %v173, %v149
    %v175 = vsel %vm50, %v47, %v172
    %v176 = vsel %vm50, 0, %v174
    %v177 = vmul.f32 %v175, %v175
    %v178 = vmul.f32 %v177, -0.001358992
    %v179 = vadd.f32 %v178, 0.041655596
    %v180 = vmul.f32 %v177, %v179
    %v181 = vadd.f32 %v180, -0.4999988
    %v182 = vmul.f32 %v177, %v181
    %v183 = vadd.f32 1.0, %v182
    %v184 = vmul.f32 %v175, %v175
    %v185 = vmul.f32 %v184, -0.00019511016
    %v186 = vadd.f32 %v185, 0.008332121
    %v187 = vmul.f32 %v184, %v186
    %v188 = vadd.f32 %v187, -0.16666654
    %v189 = vmul.f32 %v184, %v188
    %v190 = vadd.f32 %v189, 1.0
    %v191 = vmul.f32 %v190, %v175
    %vm192 = vweird.f32 %v47
    %v193 = vand.u32 %v176, 3
    %vm194 = vcmp.lt.s32.totalorder %v193, 2
    %vm195 = vcmp.eq.s32.totalorder %v193, 0
    %v196 = vxor.u32 %v191, 2147483648
    %v197 = vsel %vm195, %v183, %v196
    %vm198 = vcmp.eq.s32.totalorder %v193, 2
    %v199 = vxor.u32 %v183, 2147483648
    %v200 = vsel %vm198, %v199, %v191
    %v201 = vsel %vm194, %v197, %v200
    %v202 = vsel %vm192, nan, %v201
    %v203 = vand.u32 2147483647, %v47
    %vm204 = vcmp.le.f32.partialorder %v203, 0.7853982
    %vm205 = vcmp.lt.s32.totalorder %v47, 0
    %v206 = vand.u32 %v47, 2139095040
    %v207 = vshrl.u32 %v206, 23
    %v208 = vsub.s32 %v207, 127
    %v209 = vand.u32 2147483647, %v47
    %v210 = vand.u32 %v209, 8388607
    %v211 = vor.u32 %v210, 8388608
    %v212 = vsub.s32 0, %v211
    %v213 = vadd.s32 %v208, 1
    %vm214 = vcmp.gt.s32.totalorder %v213, 0
    %v215 = vsel %vm214, %v213, 0
    %v216 = vshrl.u32 %v215, 5
    %v217 = vand.u32 %v215, 31
    %v218 = vsub.s32 32, %v217
    %v219 = vshrl.u32 683565275, %v218
    %v220 = vshll.u32 683565275, %v217
    %v221 = vshrl.u32 2475754826, %v218
    %v222 = vor.u32 %v220, %v221
    %v223 = vshll.u32 2475754826, %v217
    %v224 = vshrl.u32 2131351028, %v218
    %v225 = vor.u32 %v223, %v224
    %v226 = vshll.u32 2131351028, %v217
    %v227 = vshrl.u32 2102212464, %v218
    %v228 = vor.u32 %v226, %v227
    %v229 = vshll.u32 2102212464, %v217
    %v230 = vshrl.u32 920167782, %v218
    %v231 = vor.u32 %v229, %v230
    %v232 = vshll.u32 920167782, %v217
    %v233 = vshrl.u32 1326507024, %v218
    %v234 = vor.u32 %v232, %v233
    %vm235 = vcmp.lt.s32.totalorder %v216, 1
    %vm236 = vcmp.lt.s32.totalorder %v216, 2
    %vm237 = vcmp.lt.s32.totalorder %v216, 3
    %vm238 = vcmp.lt.s32.totalorder %v216, 4
    %v239 = vsel %vm235, %v219, %v222
    %v240 = vsel %vm238, %v228, 2102212464
    %v241 = vsel %vm237, %v225, %v240
    %v242 = vsel %vm236, %v239, %v241
    %v243 = vsel %vm235, %v222, %v225
    %v244 = vsel %vm238, %v231, 920167782
    %v245 = vsel %vm237, %v228, %v244
    %v246 = vsel %vm236, %v243, %v245
    %v247 = vsel %vm235, %v225, %v228
    %v248 = vsel %vm238, %v234, 1326507024
    %v249 = vsel %vm237, %v231, %v248
    %v250 = vsel %vm236, %v247, %v249
    %v251 = vshll.u32 %v211, 8
    %v252 = vand.u32 %v251, 65535
    %v253 = vshrl.u32 %v251, 16
    %v254 = vand.u32 %v250, 65535
    %v255 = vshrl.u32 %v250, 16
    %v256 = vmul.u32 %v252, %v254
    %v257 = vmul.u32 %v252, %v255
    %v258 = vmul.u32 %v253, %v254
    %v259 = vmul.u32 %v253, %v255
    %v260 = vshll.u32 %v257, 16
    %v261 = vshrl.u32 %v257, 16
    %v262 = vshll.u32 %v258, 16
    %v263 = vshrl.u32 %v258, 16
    %vm264 = vc.u32 %v256, %v260
    %v265 = vsel %vm264, 1, 0
    %v266 = vadd.s32 %v256, %v260
    %v267 = vadd.s32 %v259, %v265
    %vm268 = vc.u32 %v266, %v262
    %v269 = vsel %vm268, 1, 0
    %v270 = vadd.s32 %v266, %v262
    %v271 = vadd.s32 %v267, %v269
    %v272 = vadd.s32 %v271, %v261
    %v273 = vadd.s32 %v272, %v263
    %v274 = vand.u32 %v251, 65535
    %v275 = vshrl.u32 %v251, 16
    %v276 = vand.u32 %v246, 65535
    %v277 = vshrl.u32 %v246, 16
    %v278 = vmul.u32 %v274, %v276
    %v279 = vmul.u32 %v274, %v277
    %v280 = vmul.u32 %v275, %v276
    %v281 = vmul.u32 %v275, %v277
    %v282 = vshll.u32 %v279, 16
    %v283 = vshrl.u32 %v279, 16
    %v284 = vshll.u32 %v280, 16
    %v285 = vshrl.u32 %v280, 16
    %vm286 = vc.u32 %v278, %v282
    %v287 = vsel %vm286, 1, 0
    %v288 = vadd.s32 %v278, %v282
    %v289 = vadd.s32 %v281, %v287
    %vm290 = vc.u32 %v288, %v284
    %v291 = vsel %vm290, 1, 0
    %v292 = vadd.s32 %v288, %v284
    %v293 = vadd.s32 %v289, %v291
    %v294 = vadd.s32 %v293, %v283
    %v295 = vadd.s32 %v294, %v285
    %v296 = vmul.u32 %v251, %v242
    %v297 = vadd.s32 %v273, %v292
    %vm298 = vc.u32 %v273, %v292
    %v299 = vadd.s32 %v295, 1
    %v300 = vsel %vm298, %v299, %v295
    %v301 = vadd.s32 %v296, %v300
    %v302 = vadd.s32 %v301, 536870912
    %v303 = vshrl.u32 %v302, 30
    %v304 = vshll.u32 %v303, 30
    %v305 = vsub.s32 %v301, %v304
    %vm306 = vcmp.lt.s32.totalorder %v305, 0
    %v307 = vsub.s32 0, %v305
    %v308 = vsel %vm306, %v307, %v305
    %v309 = vclz %v308
    %v310 = vsub.s32 %v309, 2
    %vm311 = vcmp.gt.s32.totalorder 0, %v310
    %v312 = vsel %vm311, 0, %v310
    %v313 = vsub.s32 32, %v312
    %v314 = vshll.u32 %v305, %v312
    %v315 = vshrl.u32 %v297, %v313
    %v316 = vor.u32 %v314, %v315
    %v317 = vsub.s32 4294967266, %v312
    %v318 = vadd.s32 %v317, 127
    %v319 = vshll.u32 %v318, 23
    %v320 = vor.u32 4788187, %v319
    %v321 = vand.u32 2147483647, %v320
    %v323 = vcvt.s32.f32 %v316
    %v324 = vmul.f32 %v323, %v321
    %v325 = vxor.u32 %v324, 2147483648
    %v326 = vsel %vm205, %v325, %v324
    %v327 = vsub.s32 4, %v303
    %v328 = vsel %vm205, %v327, %v303
    %v329 = vsel %vm204, %v47, %v326
    %v330 = vsel %vm204, 0, %v328
    %v331 = vmul.f32 %v329, %v329
    %v332 = vmul.f32 %v331, -0.001358992
    %v333 = vadd.f32 %v332, 0.041655596
    %v334 = vmul.f32 %v331, %v333
    %v335 = vadd.f32 %v334, -0.4999988
    %v336 = vmul.f32 %v331, %v335
    %v337 = vadd.f32 1.0, %v336
    %v338 = vmul.f32 %v329, %v329
    %v339 = vmul.f32 %v338, -0.00019511016
    %v340 = vadd.f32 %v339, 0.008332121
    %v341 = vmul.f32 %v338, %v340
    %v342 = vadd.f32 %v341, -0.16666654
    %v343 = vmul.f32 %v338, %v342
    %v344 = vadd.f32 %v343, 1.0
    %v345 = vmul.f32 %v344, %v329
    %vm346 = vweird.f32 %v47
    %v347 = vadd.s32 %v330, 3
    %v348 = vand.u32 %v347, 3
    %vm349 = vcmp.lt.s32.totalorder %v348, 2
    %vm350 = vcmp.eq.s32.totalorder %v348, 0
    %v351 = vxor.u32 %v345, 2147483648
    %v352 = vsel %vm350, %v337, %v351
    %vm353 = vcmp.eq.s32.totalorder %v348, 2
    %v354 = vxor.u32 %v337, 2147483648
    %v355 = vsel %vm353, %v354, %v345
    %v356 = vsel %vm349, %v352, %v355
    %v357 = vsel %vm346, nan, %v356
    %v358 = vand.u32 2147483647, %v48
    %vm359 = vcmp.le.f32.partialorder %v358, 0.7853982
    %vm360 = vcmp.lt.s32.totalorder %v48, 0
    %v361 = vand.u32 %v48, 2139095040
    %v362 = vshrl.u32 %v361, 23
    %v363 = vsub.s32 %v362, 127
    %v364 = vand.u32 2147483647, %v48
    %v365 = vand.u32 %v364, 8388607
    %v366 = vor.u32 %v365, 8388608
    %v367 = vsub.s32 0, %v366
    %v368 = vadd.s32 %v363, 1
    %vm369 = vcmp.gt.s32.totalorder %v368, 0
    %v370 = vsel %vm369, %v368, 0
    %v371 = vshrl.u32 %v370, 5
    %v372 = vand.u32 %v370, 31
    %v373 = vsub.s32 32, %v372
    %v374 = vshrl.u32 683565275, %v373
    %v375 = vshll.u32 683565275, %v372
    %v376 = vshrl.u32 2475754826, %v373
    %v377 = vor.u32 %v375, %v376
    %v378 = vshll.u32 2475754826, %v372
    %v379 = vshrl.u32 2131351028, %v373
    %v380 = vor.u32 %v378, %v379
    %v381 = vshll.u32 2131351028, %v372
    %v382 = vshrl.u32 2102212464, %v373
    %v383 = vor.u32 %v381, %v382
    %v384 = vshll.u32 2102212464, %v372
    %v385 = vshrl.u32 920167782, %v373
    %v386 = vor.u32 %v384, %v385
    %v387 = vshll.u32 920167782, %v372
    %v388 = vshrl.u32 1326507024, %v373
    %v389 = vor.u32 %v387, %v388
    %vm390 = vcmp.lt.s32.totalorder %v371, 1
    %vm391 = vcmp.lt.s32.totalorder %v371, 2
    %vm392 = vcmp.lt.s32.totalorder %v371, 3
    %vm393 = vcmp.lt.s32.totalorder %v371, 4
    %v394 = vsel %vm390, %v374, %v377
    %v395 = vsel %vm393, %v383, 2102212464
    %v396 = vsel %vm392, %v380, %v395
    %v397 = vsel %vm391, %v394, %v396
    %v398 = vsel %vm390, %v377, %v380
    %v399 = vsel %vm393, %v386, 920167782
    %v400 = vsel %vm392, %v383, %v399
    %v401 = vsel %vm391, %v398, %v400
    %v402 = vsel %vm390, %v380, %v383
    %v403 = vsel %vm393, %v389, 1326507024
    %v404 = vsel %vm392, %v386, %v403
    %v405 = vsel %vm391, %v402, %v404
    %v406 = vshll.u32 %v366, 8
    %v407 = vand.u32 %v406, 65535
    %v408 = vshrl.u32 %v406, 16
    %v409 = vand.u32 %v405, 65535
    %v410 = vshrl.u32 %v405, 16
    %v411 = vmul.u32 %v407, %v409
    %v412 = vmul.u32 %v407, %v410
    %v413 = vmul.u32 %v408, %v409
    %v414 = vmul.u32 %v408, %v410
    %v415 = vshll.u32 %v412, 16
    %v416 = vshrl.u32 %v412, 16
    %v417 = vshll.u32 %v413, 16
    %v418 = vshrl.u32 %v413, 16
    %vm419 = vc.u32 %v411, %v415
    %v420 = vsel %vm419, 1, 0
    %v421 = vadd.s32 %v411, %v415
    %v422 = vadd.s32 %v414, %v420
    %vm423 = vc.u32 %v421, %v417
    %v424 = vsel %vm423, 1, 0
    %v425 = vadd.s32 %v421, %v417
    %v426 = vadd.s32 %v422, %v424
    %v427 = vadd.s32 %v426, %v416
    %v428 = vadd.s32 %v427, %v418
    %v429 = vand.u32 %v406, 65535
    %v430 = vshrl.u32 %v406, 16
    %v431 = vand.u32 %v401, 65535
    %v432 = vshrl.u32 %v401, 16
    %v433 = vmul.u32 %v429, %v431
    %v434 = vmul.u32 %v429, %v432
    %v435 = vmul.u32 %v430, %v431
    %v436 = vmul.u32 %v430, %v432
    %v437 = vshll.u32 %v434, 16
    %v438 = vshrl.u32 %v434, 16
    %v439 = vshll.u32 %v435, 16
    %v440 = vshrl.u32 %v435, 16
    %vm441 = vc.u32 %v433, %v437
    %v442 = vsel %vm441, 1, 0
    %v443 = vadd.s32 %v433, %v437
    %v444 = vadd.s32 %v436, %v442
    %vm445 = vc.u32 %v443, %v439
    %v446 = vsel %vm445, 1, 0
    %v447 = vadd.s32 %v443, %v439
    %v448 = vadd.s32 %v444, %v446
    %v449 = vadd.s32 %v448, %v438
    %v450 = vadd.s32 %v449, %v440
    %v451 = vmul.u32 %v406, %v397
    %v452 = vadd.s32 %v428, %v447
    %vm453 = vc.u32 %v428, %v447
    %v454 = vadd.s32 %v450, 1
    %v455 = vsel %vm453, %v454, %v450
    %v456 = vadd.s32 %v451, %v455
    %v457 = vadd.s32 %v456, 536870912
    %v458 = vshrl.u32 %v457, 30
    %v459 = vshll.u32 %v458, 30
    %v460 = vsub.s32 %v456, %v459
    %vm461 = vcmp.lt.s32.totalorder %v460, 0
    %v462 = vsub.s32 0, %v460
    %v463 = vsel %vm461, %v462, %v460
    %v464 = vclz %v463
    %v465 = vsub.s32 %v464, 2
    %vm466 = vcmp.gt.s32.totalorder 0, %v465
    %v467 = vsel %vm466, 0, %v465
    %v468 = vsub.s32 32, %v467
    %v469 = vshll.u32 %v460, %v467
    %v470 = vshrl.u32 %v452, %v468
    %v471 = vor.u32 %v469, %v470
    %v472 = vsub.s32 4294967266, %v467
    %v473 = vadd.s32 %v472, 127
    %v474 = vshll.u32 %v473, 23
    %v475 = vor.u32 4788187, %v474
    %v476 = vand.u32 2147483647, %v475
    %v478 = vcvt.s32.f32 %v471
    %v479 = vmul.f32 %v478, %v476
    %v480 = vxor.u32 %v479, 2147483648
    %v481 = vsel %vm360, %v480, %v479
    %v482 = vsub.s32 4, %v458
    %v483 = vsel %vm360, %v482, %v458
    %v484 = vsel %vm359, %v48, %v481
    %v485 = vsel %vm359, 0, %v483
    %v486 = vmul.f32 %v484, %v484
    %v487 = vmul.f32 %v486, -0.001358992
    %v488 = vadd.f32 %v487, 0.041655596
    %v489 = vmul.f32 %v486, %v488
    %v490 = vadd.f32 %v489, -0.4999988
    %v491 = vmul.f32 %v486, %v490
    %v492 = vadd.f32 1.0, %v491
    %v493 = vmul.f32 %v484, %v484
    %v494 = vmul.f32 %v493, -0.00019511016
    %v495 = vadd.f32 %v494, 0.008332121
    %v496 = vmul.f32 %v493, %v495
    %v497 = vadd.f32 %v496, -0.16666654
    %v498 = vmul.f32 %v493, %v497
    %v499 = vadd.f32 %v498, 1.0
    %v500 = vmul.f32 %v499, %v484
    %vm501 = vweird.f32 %v48
    %v502 = vadd.s32 %v485, 3
    %v503 = vand.u32 %v502, 3
    %vm504 = vcmp.lt.s32.totalorder %v503, 2
    %vm505 = vcmp.eq.s32.totalorder %v503, 0
    %v506 = vxor.u32 %v500, 2147483648
    %v507 = vsel %vm505, %v492, %v506
    %vm508 = vcmp.eq.s32.totalorder %v503, 2
    %v509 = vxor.u32 %v492, 2147483648
    %v510 = vsel %vm508, %v509, %v500
    %v511 = vsel %vm504, %v507, %v510
    %v512 = vsel %vm501, nan, %v511
    %v513 = vmul.f32 %v512, %v512
    %v514 = vsub.f32 1.0, %v513
    %v515 = vmul.f32 %v39, %v39
    %v516 = vmul.f32 %v41, %v41
    %v517 = vmul.f32 %v29, %v29
    %v518 = vmul.f32 %v31, %v31
    %v519 = vmul.f32 %v515, %v516
    %v520 = vrcp.pop %v519
    %v521 = vmul.f32 %v519, %v520
    %v522 = vsub.f32 1.0, %v521
    %v523 = vmul.f32 %v520, %v522
    %v524 = vadd.f32 %v520, %v523
    %vm525 = vweird.f32 %v519
    %vm526 = vweird.f32 %v520
    %vm527 = vmor %vm525, %vm526
    %v528 = vsel %vm527, %v520, %v524
    %v529 = vand.u32 2147483647, %v519
    %vm530 = vcmp.eq.f32.partialorder %v529, 8.507059e+37
    %v531 = vand.u32 %v519, 2147483648
    %v532 = vor.u32 1.1754944e-38, %v531
    %v533 = vsel %vm530, %v532, %v528
    %v534 = vmul.f32 1.0, %v533
    %v535 = vmul.f32 %v516, %v534
    %v536 = vmul.f32 %v515, %v534
    %v537 = vmul.f32 %v44, %v202
    %v538 = vmul.f32 %v45, %v357
    %v539 = vadd.f32 %v537, %v538
    %v540 = vmul.f32 %v45, %v202
    %v541 = vmul.f32 %v44, %v357
    %v542 = vsub.f32 %v540, %v541
    %v543 = vmul.f32 %v539, %v539
    %v544 = vmul.f32 %v543, %v535
    %v545 = vmul.f32 %v542, %v542
    %v546 = vmul.f32 %v545, %v536
    %v547 = vadd.f32 %v544, %v546
    %v548 = vmul.f32 %v547, 2.0
    %v549 = vmul.f32 %v518, %v535
    %v550 = vmul.f32 %v517, %v536
    %v551 = vadd.f32 %v549, %v550
    %v552 = vmul.f32 %v551, %v513
    %v553 = vmul.f32 %v518, %v536
    %v554 = vmul.f32 %v517, %v535
    %v555 = vadd.f32 %v553, %v554
    %v556 = vmul.f32 %v555, %v514
    %v557 = vadd.f32 %v552, %v556
    %v558 = vmul.f32 %v557, 0.5
    %v559 = vmul.f32 %v39, %v41
    %v560 = vmul.f32 %v29, %v31
    %v561 = vrcp.pop %v560
    %v562 = vmul.f32 %v560, %v561
    %v563 = vsub.f32 1.0, %v562
    %v564 = vmul.f32 %v561, %v563
    %v565 = vadd.f32 %v561, %v564
    %vm566 = vweird.f32 %v560
    %vm567 = vweird.f32 %v561
    %vm568 = vmor %vm566, %vm567
    %v569 = vsel %vm568, %v561, %v565
    %v570 = vand.u32 2147483647, %v560
    %vm571 = vcmp.eq.f32.partialorder %v570, 8.507059e+37
    %v572 = vand.u32 %v560, 2147483648
    %v573 = vor.u32 1.1754944e-38, %v572
    %v574 = vsel %vm571, %v573, %v569
    %v575 = vmul.f32 %v559, %v574
    %v576 = vlog2.pop %v575
    %v577 = vmul.f32 %v576, 0.6931472
    %v578 = vadd.f32 %v548, %v558
    %v579 = vadd.f32 %v578, %v577
    %v580 = vsub.f32 %v579, 1.0
    %v581 = vadd.f32 %v580, 1.0
    %v582 = vlog2.pop %v581
    %v583 = vmul.f32 %v582, 0.6931472
    %v584 = vmul.f32 -0.5, %v580
    %v585 = vadd.f32 %v584, 1.0
    %v586 = vmul.f32 %v585, %v580
    %v587 = vand.u32 2147483647, %v580
    %vm588 = vcmp.lt.f32.partialorder %v587, 0.0004427343
    %v589 = vsel %vm588, %v586, %v583
    %v590 = vadd.f32 %v589, 1.0
    %v591 = vrcp.pop %v590
    %v592 = vmul.f32 %v590, %v591
    %v593 = vsub.f32 1.0, %v592
    %v594 = vmul.f32 %v591, %v593
    %v595 = vadd.f32 %v591, %v594
    %vm596 = vweird.f32 %v590
    %vm597 = vweird.f32 %v591
    %vm598 = vmor %vm596, %vm597
    %v599 = vsel %vm598, %v591, %v595
    %v600 = vand.u32 2147483647, %v590
    %vm601 = vcmp.eq.f32.partialorder %v600, 8.507059e+37
    %v602 = vand.u32 %v590, 2147483648
    %v603 = vor.u32 1.1754944e-38, %v602
    %v604 = vsel %vm601, %v603, %v599
    %v605 = vmul.f32 1.0, %v604
    %v606 = vsub.f32 1.0, %v605
    %607 = vst [vmem:[#allocation5] sm:$0xff] %v606
    // Predicated region
    $region10: #{tpu_custom_call.1} parent=1 // pred_check
      _
    $region11: #{tpu_custom_call.1} parent=1 // pred_check_branch
      %609 = sbr.rel (0) target = $region13
    $region12: #{tpu_custom_call.1} parent=1 // pred_region
      %611 = vsyncadd [#allocation4], 0
      %s613 = sshll.u32 [#allocation5], 4
      %s614 = int_to_ptr.vmem [resolvable:$true] %s613
      %s615 = sshll.u32 %s1, 4
      %s616 = int_to_ptr.hbm [resolvable:$true] %s615
      %618 = dma.vmem_to_hbm [thread:$0]  %s614, 128, %s616, [#allocation4]
    $region13: #{tpu_custom_call.1} parent=1 // pred_fallthru
      _
    // Predicated region
    $region14: #{tpu_custom_call.1} parent=1 // pred_check
      _
    $region15: #{tpu_custom_call.1} parent=1 // pred_check_branch
      %620 = sbr.rel (0) target = $region17
    $region16: #{tpu_custom_call.1} parent=1 // pred_region
      %622 = dma.done [#allocation4], 128
    $region17: #{tpu_custom_call.1} parent=1 // pred_fallthru
      _
    %623 = vsyncpa [#allocation3], 1
    %624 = vsyncpa [#allocation4], 1

</llo_original>
